<compile_context>
chip_gen: v5e
topology: v5e:2x2
jax: 0.10.0
libtpu: 0.0.40
codegen_flags: <defaults>
</compile_context>

<pallas_src>
import functools
import math

import jax
import jax.numpy as jnp
from jax.experimental import pallas as pl
from jax.experimental.pallas import tpu as pltpu


def _featurizer_kernel(xt_ref, w1_ref, b1_ref, w2_ref, b2_ref, w3_ref, b3_ref,
                       o_ref, s1, s2, *, block_b, L):
    R0 = block_b * L           # conv1 rows   (per-sample stride L)
    R1 = block_b * (L // 2)    # conv2 rows   (per-sample stride L/2)
    R2 = block_b * (L // 8)    # output rows  (per-sample stride L/8)

    def pooled_tap(s, off, m, stride):
        # MaxPool1d(2) of the previous layer fused into the tap load: the two
        # pool operands are ref-level strided loads (no value-level shifts).
        return jnp.maximum(s[pl.ds(off, m, stride), :],
                           s[pl.ds(off + 1, m, stride), :])

    # ---- conv1 (1 -> 32) + ReLU: VPU broadcast path (tiny share of FLOPs) ----
    xt = jnp.transpose(xt_ref[0], (1, 0))             # (R0, 8); lanes 0..2 = taps
    w1 = w1_ref[...]                                   # (3, 32)
    y1 = jnp.maximum(
        xt[:, 0:1] * w1[0:1, :]
        + xt[:, 1:2] * w1[1:2, :]
        + xt[:, 2:3] * w1[2:3, :]
        + b1_ref[...], 0.0)                            # (R0, 32)
    s1[0:R0, :] = y1
    # s1 rows [R0, R0+8) stay unwritten; only junk output rows ever read them.

    # ---- conv2 (32 -> 64) + ReLU: 3 accumulated K=32 matmuls -----------------
    # pool1 folded into stride-2 tap loads at offsets 0/2/4.
    y2 = jnp.dot(pooled_tap(s1, 0, R1, 2), w2_ref[0:32, :],
                 preferred_element_type=jnp.float32)
    y2 = y2 + jnp.dot(pooled_tap(s1, 2, R1, 2), w2_ref[32:64, :],
                      preferred_element_type=jnp.float32)
    y2 = y2 + jnp.dot(pooled_tap(s1, 4, R1, 2), w2_ref[64:96, :],
                      preferred_element_type=jnp.float32)
    y2 = jnp.maximum(y2 + b2_ref[...], 0.0)            # (R1, 64)
    s2[0:R1, :] = y2

    # ---- conv3 (64 -> 128) + ReLU, parity split over output positions -------
    # pool2 folded into stride-4 tap loads; pool3 becomes the plain max below.
    def conv3_half(base):
        y = jnp.dot(pooled_tap(s2, base + 0, R2, 4), w3_ref[0:64, :],
                    preferred_element_type=jnp.float32)
        y = y + jnp.dot(pooled_tap(s2, base + 2, R2, 4), w3_ref[64:128, :],
                        preferred_element_type=jnp.float32)
        y = y + jnp.dot(pooled_tap(s2, base + 4, R2, 4), w3_ref[128:192, :],
                        preferred_element_type=jnp.float32)
        return jnp.maximum(y + b3_ref[...], 0.0)        # (R2, 128)

    # TODO(synk): nn.Dropout(0.1) is identity at inference; not applied here.
    o_ref[...] = jnp.maximum(conv3_half(0), conv3_half(2))


def featurizer_forward(x_ncl, params, block_b=None):
    """x_ncl: (N, 1, L) float32 (PyTorch Conv1d layout). Returns (N, 128 * L_out)."""
    (w1, b1), (w2, b2), (w3, b3) = params
    n, cin, L = x_ncl.shape
    assert cin == 1
    # TODO(synk): general (non multiple-of-8) L would need per-layer re-padding.
    assert L % 8 == 0, "this kernel assumes L % 8 == 0"

    l1 = L - 2;  p1 = l1 // 2
    l2 = p1 - 2; p2 = l2 // 2
    l3 = p2 - 2; p3 = l3 // 2
    assert p3 >= 1, "input too short for three conv/pool stages"
    s3_rows = L // 8                       # per-sample output row stride (p3 valid)

    # ---- block_b: MXU-M / VMEM driven; keep grid >= 2 when the batch allows
    # it (v7x has two TensorCores). -------------------------------------------
    if block_b is None:
        block_b = max(1, -(-4096 // L))                 # target M ~ 512 per conv3 half
        block_b = min(block_b, max(2, -(-n // 2)))
    # alignment: lane-dense input rows (block_b*L % 128 == 0) and output block
    # sublanes (block_b*s3_rows % 8 == 0).
    a1 = 8 // math.gcd(s3_rows, 8)
    a2 = 128 // math.gcd(L, 128)
    align = (a1 * a2) // math.gcd(a1, a2)
    block_b = ((block_b + align - 1) // align) * align

    def vmem_bytes(b):                     # rough live-VMEM estimate (128-lane pads)
        r0, r1, r2 = b * L, b * L // 2, b * L // 8
        scratch = 4 * 128 * ((r0 + 8) + (r1 + 8))
        io = 4 * (2 * 8 * r0 + 2 * 128 * r2) + 4 * 2 * 128 * (96 + 192 + 8)
        return scratch + io
    while block_b > align and vmem_bytes(block_b) > 20 * 1024 * 1024:
        block_b -= align

    grid = pl.cdiv(n, block_b)
    n_pad = grid * block_b
    rows = block_b * L

    # ---- host-side layout prep (layout plumbing only; no compute hoisted) ----
    x = x_ncl[:, 0, :].astype(jnp.float32)                          # (n, L)
    if n_pad != n:
        x = jnp.concatenate([x, jnp.zeros((n_pad - n, L), jnp.float32)], 0)
    taps = jnp.stack([x,
                      jnp.pad(x[:, 1:], ((0, 0), (0, 1))),
                      jnp.pad(x[:, 2:], ((0, 0), (0, 2)))], axis=0)  # (3, n_pad, L)
    taps = jnp.pad(taps, ((0, 5), (0, 0), (0, 0)))                  # sublane-pad -> 8
    xt = jnp.transpose(taps.reshape(8, grid, rows), (1, 0, 2))      # (grid, 8, rows)

    # conv weights (Cout, Cin, 3) -> (3*Cin, Cout), tap-major rows; biases (1, Cout).
    def wmat(w):
        return jnp.transpose(w, (2, 1, 0)).astype(jnp.float32).reshape(-1, w.shape[0])
    w1m, w2m, w3m = wmat(w1), wmat(w2), wmat(w3)        # (3,32) (96,64) (192,128)
    b1m, b2m, b3m = (b.reshape(1, -1).astype(jnp.float32) for b in (b1, b2, b3))

    kernel = functools.partial(_featurizer_kernel, block_b=block_b, L=L)

    def full(arr):
        nd = arr.ndim
        return pl.BlockSpec(arr.shape, lambda i, _nd=nd: (0,) * _nd)

    flops = 2 * n_pad * L * (96 + 3072 + 6144)
    bytes_accessed = 4 * (n_pad * L * 8 + n_pad * s3_rows * 128
                          + w1m.size + w2m.size + w3m.size + 32 + 64 + 128)

    out = pl.pallas_call(
        kernel,
        out_shape=jax.ShapeDtypeStruct((n_pad * s3_rows, 128), jnp.float32),
        grid_spec=pltpu.PrefetchScalarGridSpec(
            num_scalar_prefetch=0,
            grid=(grid,),
            in_specs=[pl.BlockSpec((1, 8, rows), lambda i: (i, 0, 0)),
                      full(w1m), full(b1m),
                      full(w2m), full(b2m),
                      full(w3m), full(b3m)],
            out_specs=pl.BlockSpec((block_b * s3_rows, 128), lambda i: (i, 0)),
            scratch_shapes=[pltpu.VMEM((rows + 8, 32), jnp.float32),
                            pltpu.VMEM((rows // 2 + 8, 64), jnp.float32)],
        ),
        compiler_params=pltpu.CompilerParams(
            dimension_semantics=("parallel",),
            vmem_limit_bytes=32 * 1024 * 1024),
        cost_estimate=pl.CostEstimate(flops=flops, transcendentals=0,
                                      bytes_accessed=bytes_accessed),
    )(xt, w1m, b1m, w2m, b2m, w3m, b3m)

    # Drop batch padding + per-sample junk rows; PyTorch's x.view(N, -1)
    # channel-major flatten stays in the wrapper so the kernel output block is
    # lane-dense.
    feats = out.reshape(n_pad, s3_rows, 128)[:n, :p3, :]             # (n, p3, 128)
    return jnp.transpose(feats, (0, 2, 1)).reshape(n, -1)            # (n, 128*p3)


def ref_forward(x_ncl, params):
    """Pure-JAX reference (inference mode)."""
    h = x_ncl.astype(jnp.float32)
    for w, b in params:
        h = jax.lax.conv_general_dilated(
            h, w.astype(jnp.float32), window_strides=(1,), padding="VALID",
            dimension_numbers=("NCH", "OIH", "NCH"))
        h = jnp.maximum(h + b[None, :, None], 0.0)
        lh = h.shape[-1] // 2
        h = jnp.maximum(h[:, :, 0:2 * lh:2], h[:, :, 1:2 * lh:2])
    return h.reshape(h.shape[0], -1)


def _init_conv(key, cout, cin, k=3):
    # PyTorch default Conv1d init: U(-1/sqrt(cin*k), 1/sqrt(cin*k))
    kw, kb = jax.random.split(key)
    bound = 1.0 / float(cin * k) ** 0.5
    w = jax.random.uniform(kw, (cout, cin, k), jnp.float32, -bound, bound)
    b = jax.random.uniform(kb, (cout,), jnp.float32, -bound, bound)
    return w, b


if __name__ == "__main__":
    key = jax.random.PRNGKey(0)
    kx, k1, k2, k3 = jax.random.split(key, 4)
    params = [_init_conv(k1, 32, 1),
              _init_conv(k2, 64, 32),
              _init_conv(k3, 128, 64)]

    # (N=2, C=1, L=64): final features are (2, 128 * 6) = (2, 768)
    x = jax.random.normal(kx, (2, 1, 64), jnp.float32)

    out = featurizer_forward(x, params)
    out = jax.block_until_ready(out)

    ref = ref_forward(x, params)
    assert out.shape == (2, 128 * 6), out.shape
    assert jnp.allclose(out, ref, atol=1e-4, rtol=1e-4), float(
        jnp.max(jnp.abs(out - ref)))

    print("KERNEL_OK")
</pallas_src>

<mosaic_0001>
module attributes {stable_mosaic.version = 11 : i64} {
  func.func @_featurizer_kernel(%arg0: i32, %arg1: memref<1x8x128xf32, #tpu.memory_space<vmem>>, %arg2: memref<3x32xf32, #tpu.memory_space<vmem>>, %arg3: memref<1x32xf32, #tpu.memory_space<vmem>>, %arg4: memref<96x64xf32, #tpu.memory_space<vmem>>, %arg5: memref<1x64xf32, #tpu.memory_space<vmem>>, %arg6: memref<192x128xf32, #tpu.memory_space<vmem>>, %arg7: memref<1x128xf32, #tpu.memory_space<vmem>>, %arg8: memref<16x128xf32, #tpu.memory_space<vmem>>, %arg9: memref<136x32xf32, #tpu.memory_space<vmem>>, %arg10: memref<72x64xf32, #tpu.memory_space<vmem>>) attributes {dimension_semantics = [#tpu.dimension_semantics<parallel>], iteration_bounds = array<i64: 1>, scalar_prefetch = 0 : i64, scratch_operands = 2 : i64, tpu.core_type = #tpu.core_type<tc>, window_params = [{transform_indices = @transform_0, window_bounds = array<i64: 1, 8, 128>}, {pipeline_mode = #tpu.pipeline_mode<synchronous>, transform_indices = @transform_1, window_bounds = array<i64: 3, 32>}, {pipeline_mode = #tpu.pipeline_mode<synchronous>, transform_indices = @transform_2, window_bounds = array<i64: 1, 32>}, {pipeline_mode = #tpu.pipeline_mode<synchronous>, transform_indices = @transform_3, window_bounds = array<i64: 96, 64>}, {pipeline_mode = #tpu.pipeline_mode<synchronous>, transform_indices = @transform_4, window_bounds = array<i64: 1, 64>}, {pipeline_mode = #tpu.pipeline_mode<synchronous>, transform_indices = @transform_5, window_bounds = array<i64: 192, 128>}, {pipeline_mode = #tpu.pipeline_mode<synchronous>, transform_indices = @transform_6, window_bounds = array<i64: 1, 128>}, {transform_indices = @transform_7, window_bounds = array<i64: 16, 128>}]} {
    %c0 = arith.constant 0 : index
    %c0_0 = arith.constant 0 : index
    %c0_1 = arith.constant 0 : index
    %0 = vector.load %arg1[%c0, %c0_0, %c0_1] : memref<1x8x128xf32, #tpu.memory_space<vmem>>, vector<1x8x128xf32>
    %1 = vector.shape_cast %0 : vector<1x8x128xf32> to vector<8x128xf32>
    %2 = tpu.transpose %1, [1, 0] : vector<8x128xf32> -> vector<128x8xf32>
    %c0_2 = arith.constant 0 : index
    %c0_3 = arith.constant 0 : index
    %3 = vector.load %arg2[%c0_2, %c0_3] : memref<3x32xf32, #tpu.memory_space<vmem>>, vector<3x32xf32>
    %4 = vector.extract_strided_slice %2 {offsets = [0, 0], sizes = [128, 1], strides = [1, 1]} : vector<128x8xf32> to vector<128x1xf32>
    %5 = vector.extract_strided_slice %3 {offsets = [0, 0], sizes = [1, 32], strides = [1, 1]} : vector<3x32xf32> to vector<1x32xf32>
    %6 = vector.broadcast %4 : vector<128x1xf32> to vector<128x32xf32>
    %7 = vector.broadcast %5 : vector<1x32xf32> to vector<128x32xf32>
    %8 = arith.mulf %6, %7 : vector<128x32xf32>
    %9 = vector.extract_strided_slice %2 {offsets = [0, 1], sizes = [128, 1], strides = [1, 1]} : vector<128x8xf32> to vector<128x1xf32>
    %10 = vector.extract_strided_slice %3 {offsets = [1, 0], sizes = [1, 32], strides = [1, 1]} : vector<3x32xf32> to vector<1x32xf32>
    %11 = vector.broadcast %9 : vector<128x1xf32> to vector<128x32xf32>
    %12 = vector.broadcast %10 : vector<1x32xf32> to vector<128x32xf32>
    %13 = arith.mulf %11, %12 : vector<128x32xf32>
    %14 = arith.addf %8, %13 : vector<128x32xf32>
    %15 = vector.extract_strided_slice %2 {offsets = [0, 2], sizes = [128, 1], strides = [1, 1]} : vector<128x8xf32> to vector<128x1xf32>
    %16 = vector.extract_strided_slice %3 {offsets = [2, 0], sizes = [1, 32], strides = [1, 1]} : vector<3x32xf32> to vector<1x32xf32>
    %17 = vector.broadcast %15 : vector<128x1xf32> to vector<128x32xf32>
    %18 = vector.broadcast %16 : vector<1x32xf32> to vector<128x32xf32>
    %19 = arith.mulf %17, %18 : vector<128x32xf32>
    %20 = arith.addf %14, %19 : vector<128x32xf32>
    %c0_4 = arith.constant 0 : index
    %c0_5 = arith.constant 0 : index
    %21 = vector.load %arg3[%c0_4, %c0_5] : memref<1x32xf32, #tpu.memory_space<vmem>>, vector<1x32xf32>
    %22 = vector.broadcast %21 : vector<1x32xf32> to vector<128x32xf32>
    %23 = arith.addf %20, %22 : vector<128x32xf32>
    %cst = arith.constant 0.000000e+00 : f32
    %24 = vector.broadcast %cst : f32 to vector<128x32xf32>
    %25 = arith.maximumf %23, %24 : vector<128x32xf32>
    %c0_6 = arith.constant 0 : index
    %c0_7 = arith.constant 0 : index
    %26 = vector.load %arg9[%c0_6, %c0_7] : memref<136x32xf32, #tpu.memory_space<vmem>>, vector<128x32xf32>
    tpu.vector_store %arg9[%c0_6, %c0_7], %25 {strides = array<i32>} : memref<136x32xf32, #tpu.memory_space<vmem>>, vector<128x32xf32>,
    %c0_8 = arith.constant 0 : index
    %c0_9 = arith.constant 0 : index
    %27 = tpu.strided_load %arg9[%c0_8, %c0_9] {strides = array<i32: 2, 1>} : memref<136x32xf32, #tpu.memory_space<vmem>>, vector<64x32xf32>
    %c1 = arith.constant 1 : index
    %c0_10 = arith.constant 0 : index
    %28 = tpu.strided_load %arg9[%c1, %c0_10] {strides = array<i32: 2, 1>} : memref<136x32xf32, #tpu.memory_space<vmem>>, vector<64x32xf32>
    %29 = arith.maximumf %27, %28 : vector<64x32xf32>
    %c0_11 = arith.constant 0 : index
    %c0_12 = arith.constant 0 : index
    %30 = vector.load %arg4[%c0_11, %c0_12] : memref<96x64xf32, #tpu.memory_space<vmem>>, vector<32x64xf32>
    %cst_13 = arith.constant dense<0.000000e+00> : vector<64x64xf32>
    %31 = tpu.matmul %29, %30, %cst_13 {dimension_numbers = #tpu.dot_dimension_numbers<[1], [0], [0], [1], [0, 0, 1, 1], [], []>} : vector<64x32xf32>, vector<32x64xf32>, vector<64x64xf32> -> vector<64x64xf32>
    %c2 = arith.constant 2 : index
    %c0_14 = arith.constant 0 : index
    %32 = tpu.strided_load %arg9[%c2, %c0_14] {strides = array<i32: 2, 1>} : memref<136x32xf32, #tpu.memory_space<vmem>>, vector<64x32xf32>
    %c3 = arith.constant 3 : index
    %c0_15 = arith.constant 0 : index
    %33 = tpu.strided_load %arg9[%c3, %c0_15] {strides = array<i32: 2, 1>} : memref<136x32xf32, #tpu.memory_space<vmem>>, vector<64x32xf32>
    %34 = arith.maximumf %32, %33 : vector<64x32xf32>
    %c32 = arith.constant 32 : index
    %c0_16 = arith.constant 0 : index
    %35 = vector.load %arg4[%c32, %c0_16] : memref<96x64xf32, #tpu.memory_space<vmem>>, vector<32x64xf32>
    %cst_17 = arith.constant dense<0.000000e+00> : vector<64x64xf32>
    %36 = tpu.matmul %34, %35, %cst_17 {dimension_numbers = #tpu.dot_dimension_numbers<[1], [0], [0], [1], [0, 0, 1, 1], [], []>} : vector<64x32xf32>, vector<32x64xf32>, vector<64x64xf32> -> vector<64x64xf32>
    %37 = arith.addf %31, %36 : vector<64x64xf32>
    %c4 = arith.constant 4 : index
    %c0_18 = arith.constant 0 : index
    %38 = tpu.strided_load %arg9[%c4, %c0_18] {strides = array<i32: 2, 1>} : memref<136x32xf32, #tpu.memory_space<vmem>>, vector<64x32xf32>
    %c5 = arith.constant 5 : index
    %c0_19 = arith.constant 0 : index
    %39 = tpu.strided_load %arg9[%c5, %c0_19] {strides = array<i32: 2, 1>} : memref<136x32xf32, #tpu.memory_space<vmem>>, vector<64x32xf32>
    %40 = arith.maximumf %38, %39 : vector<64x32xf32>
    %c64 = arith.constant 64 : index
    %c0_20 = arith.constant 0 : index
    %41 = vector.load %arg4[%c64, %c0_20] : memref<96x64xf32, #tpu.memory_space<vmem>>, vector<32x64xf32>
    %cst_21 = arith.constant dense<0.000000e+00> : vector<64x64xf32>
    %42 = tpu.matmul %40, %41, %cst_21 {dimension_numbers = #tpu.dot_dimension_numbers<[1], [0], [0], [1], [0, 0, 1, 1], [], []>} : vector<64x32xf32>, vector<32x64xf32>, vector<64x64xf32> -> vector<64x64xf32>
    %43 = arith.addf %37, %42 : vector<64x64xf32>
    %c0_22 = arith.constant 0 : index
    %c0_23 = arith.constant 0 : index
    %44 = vector.load %arg5[%c0_22, %c0_23] : memref<1x64xf32, #tpu.memory_space<vmem>>, vector<1x64xf32>
    %45 = vector.broadcast %44 : vector<1x64xf32> to vector<64x64xf32>
    %46 = arith.addf %43, %45 : vector<64x64xf32>
    %cst_24 = arith.constant 0.000000e+00 : f32
    %47 = vector.broadcast %cst_24 : f32 to vector<64x64xf32>
    %48 = arith.maximumf %46, %47 : vector<64x64xf32>
    %c0_25 = arith.constant 0 : index
    %c0_26 = arith.constant 0 : index
    %49 = vector.load %arg10[%c0_25, %c0_26] : memref<72x64xf32, #tpu.memory_space<vmem>>, vector<64x64xf32>
    tpu.vector_store %arg10[%c0_25, %c0_26], %48 {strides = array<i32>} : memref<72x64xf32, #tpu.memory_space<vmem>>, vector<64x64xf32>,
    %c0_27 = arith.constant 0 : index
    %c0_28 = arith.constant 0 : index
    %50 = tpu.strided_load %arg10[%c0_27, %c0_28] {strides = array<i32: 4, 1>} : memref<72x64xf32, #tpu.memory_space<vmem>>, vector<16x64xf32>
    %c1_29 = arith.constant 1 : index
    %c0_30 = arith.constant 0 : index
    %51 = tpu.strided_load %arg10[%c1_29, %c0_30] {strides = array<i32: 4, 1>} : memref<72x64xf32, #tpu.memory_space<vmem>>, vector<16x64xf32>
    %52 = arith.maximumf %50, %51 : vector<16x64xf32>
    %c0_31 = arith.constant 0 : index
    %c0_32 = arith.constant 0 : index
    %53 = vector.load %arg6[%c0_31, %c0_32] : memref<192x128xf32, #tpu.memory_space<vmem>>, vector<64x128xf32>
    %cst_33 = arith.constant dense<0.000000e+00> : vector<16x128xf32>
    %54 = tpu.matmul %52, %53, %cst_33 {dimension_numbers = #tpu.dot_dimension_numbers<[1], [0], [0], [1], [0, 0, 1, 1], [], []>} : vector<16x64xf32>, vector<64x128xf32>, vector<16x128xf32> -> vector<16x128xf32>
    %c2_34 = arith.constant 2 : index
    %c0_35 = arith.constant 0 : index
    %55 = tpu.strided_load %arg10[%c2_34, %c0_35] {strides = array<i32: 4, 1>} : memref<72x64xf32, #tpu.memory_space<vmem>>, vector<16x64xf32>
    %c3_36 = arith.constant 3 : index
    %c0_37 = arith.constant 0 : index
    %56 = tpu.strided_load %arg10[%c3_36, %c0_37] {strides = array<i32: 4, 1>} : memref<72x64xf32, #tpu.memory_space<vmem>>, vector<16x64xf32>
    %57 = arith.maximumf %55, %56 : vector<16x64xf32>
    %c64_38 = arith.constant 64 : index
    %c0_39 = arith.constant 0 : index
    %58 = vector.load %arg6[%c64_38, %c0_39] : memref<192x128xf32, #tpu.memory_space<vmem>>, vector<64x128xf32>
    %cst_40 = arith.constant dense<0.000000e+00> : vector<16x128xf32>
    %59 = tpu.matmul %57, %58, %cst_40 {dimension_numbers = #tpu.dot_dimension_numbers<[1], [0], [0], [1], [0, 0, 1, 1], [], []>} : vector<16x64xf32>, vector<64x128xf32>, vector<16x128xf32> -> vector<16x128xf32>
    %60 = arith.addf %54, %59 : vector<16x128xf32>
    %c4_41 = arith.constant 4 : index
    %c0_42 = arith.constant 0 : index
    %61 = tpu.strided_load %arg10[%c4_41, %c0_42] {strides = array<i32: 4, 1>} : memref<72x64xf32, #tpu.memory_space<vmem>>, vector<16x64xf32>
    %c5_43 = arith.constant 5 : index
    %c0_44 = arith.constant 0 : index
    %62 = tpu.strided_load %arg10[%c5_43, %c0_44] {strides = array<i32: 4, 1>} : memref<72x64xf32, #tpu.memory_space<vmem>>, vector<16x64xf32>
    %63 = arith.maximumf %61, %62 : vector<16x64xf32>
    %c128 = arith.constant 128 : index
    %c0_45 = arith.constant 0 : index
    %64 = vector.load %arg6[%c128, %c0_45] : memref<192x128xf32, #tpu.memory_space<vmem>>, vector<64x128xf32>
    %cst_46 = arith.constant dense<0.000000e+00> : vector<16x128xf32>
    %65 = tpu.matmul %63, %64, %cst_46 {dimension_numbers = #tpu.dot_dimension_numbers<[1], [0], [0], [1], [0, 0, 1, 1], [], []>} : vector<16x64xf32>, vector<64x128xf32>, vector<16x128xf32> -> vector<16x128xf32>
    %66 = arith.addf %60, %65 : vector<16x128xf32>
    %c0_47 = arith.constant 0 : index
    %c0_48 = arith.constant 0 : index
    %67 = vector.load %arg7[%c0_47, %c0_48] : memref<1x128xf32, #tpu.memory_space<vmem>>, vector<1x128xf32>
    %68 = vector.broadcast %67 : vector<1x128xf32> to vector<16x128xf32>
    %69 = arith.addf %66, %68 : vector<16x128xf32>
    %cst_49 = arith.constant 0.000000e+00 : f32
    %70 = vector.broadcast %cst_49 : f32 to vector<16x128xf32>
    %71 = arith.maximumf %69, %70 : vector<16x128xf32>
    %c2_50 = arith.constant 2 : index
    %c0_51 = arith.constant 0 : index
    %72 = tpu.strided_load %arg10[%c2_50, %c0_51] {strides = array<i32: 4, 1>} : memref<72x64xf32, #tpu.memory_space<vmem>>, vector<16x64xf32>
    %c3_52 = arith.constant 3 : index
    %c0_53 = arith.constant 0 : index
    %73 = tpu.strided_load %arg10[%c3_52, %c0_53] {strides = array<i32: 4, 1>} : memref<72x64xf32, #tpu.memory_space<vmem>>, vector<16x64xf32>
    %74 = arith.maximumf %72, %73 : vector<16x64xf32>
    %c0_54 = arith.constant 0 : index
    %c0_55 = arith.constant 0 : index
    %75 = vector.load %arg6[%c0_54, %c0_55] : memref<192x128xf32, #tpu.memory_space<vmem>>, vector<64x128xf32>
    %cst_56 = arith.constant dense<0.000000e+00> : vector<16x128xf32>
    %76 = tpu.matmul %74, %75, %cst_56 {dimension_numbers = #tpu.dot_dimension_numbers<[1], [0], [0], [1], [0, 0, 1, 1], [], []>} : vector<16x64xf32>, vector<64x128xf32>, vector<16x128xf32> -> vector<16x128xf32>
    %c4_57 = arith.constant 4 : index
    %c0_58 = arith.constant 0 : index
    %77 = tpu.strided_load %arg10[%c4_57, %c0_58] {strides = array<i32: 4, 1>} : memref<72x64xf32, #tpu.memory_space<vmem>>, vector<16x64xf32>
    %c5_59 = arith.constant 5 : index
    %c0_60 = arith.constant 0 : index
    %78 = tpu.strided_load %arg10[%c5_59, %c0_60] {strides = array<i32: 4, 1>} : memref<72x64xf32, #tpu.memory_space<vmem>>, vector<16x64xf32>
    %79 = arith.maximumf %77, %78 : vector<16x64xf32>
    %c64_61 = arith.constant 64 : index
    %c0_62 = arith.constant 0 : index
    %80 = vector.load %arg6[%c64_61, %c0_62] : memref<192x128xf32, #tpu.memory_space<vmem>>, vector<64x128xf32>
    %cst_63 = arith.constant dense<0.000000e+00> : vector<16x128xf32>
    %81 = tpu.matmul %79, %80, %cst_63 {dimension_numbers = #tpu.dot_dimension_numbers<[1], [0], [0], [1], [0, 0, 1, 1], [], []>} : vector<16x64xf32>, vector<64x128xf32>, vector<16x128xf32> -> vector<16x128xf32>
    %82 = arith.addf %76, %81 : vector<16x128xf32>
    %c6 = arith.constant 6 : index
    %c0_64 = arith.constant 0 : index
    %83 = tpu.strided_load %arg10[%c6, %c0_64] {strides = array<i32: 4, 1>} : memref<72x64xf32, #tpu.memory_space<vmem>>, vector<16x64xf32>
    %c7 = arith.constant 7 : index
    %c0_65 = arith.constant 0 : index
    %84 = tpu.strided_load %arg10[%c7, %c0_65] {strides = array<i32: 4, 1>} : memref<72x64xf32, #tpu.memory_space<vmem>>, vector<16x64xf32>
    %85 = arith.maximumf %83, %84 : vector<16x64xf32>
    %c128_66 = arith.constant 128 : index
    %c0_67 = arith.constant 0 : index
    %86 = vector.load %arg6[%c128_66, %c0_67] : memref<192x128xf32, #tpu.memory_space<vmem>>, vector<64x128xf32>
    %cst_68 = arith.constant dense<0.000000e+00> : vector<16x128xf32>
    %87 = tpu.matmul %85, %86, %cst_68 {dimension_numbers = #tpu.dot_dimension_numbers<[1], [0], [0], [1], [0, 0, 1, 1], [], []>} : vector<16x64xf32>, vector<64x128xf32>, vector<16x128xf32> -> vector<16x128xf32>
    %88 = arith.addf %82, %87 : vector<16x128xf32>
    %c0_69 = arith.constant 0 : index
    %c0_70 = arith.constant 0 : index
    %89 = vector.load %arg7[%c0_69, %c0_70] : memref<1x128xf32, #tpu.memory_space<vmem>>, vector<1x128xf32>
    %90 = vector.broadcast %89 : vector<1x128xf32> to vector<16x128xf32>
    %91 = arith.addf %88, %90 : vector<16x128xf32>
    %cst_71 = arith.constant 0.000000e+00 : f32
    %92 = vector.broadcast %cst_71 : f32 to vector<16x128xf32>
    %93 = arith.maximumf %91, %92 : vector<16x128xf32>
    %94 = arith.maximumf %71, %93 : vector<16x128xf32>
    %c0_72 = arith.constant 0 : index
    %c0_73 = arith.constant 0 : index
    %95 = vector.load %arg8[%c0_72, %c0_73] : memref<16x128xf32, #tpu.memory_space<vmem>>, vector<16x128xf32>
    tpu.vector_store %arg8[%c0_72, %c0_73], %94 {strides = array<i32>} : memref<16x128xf32, #tpu.memory_space<vmem>>, vector<16x128xf32>,
    return
  }
  func.func @transform_0(%arg0: i32) -> (i32, i32, i32) {
    %c0_i32 = arith.constant 0 : i32
    %c0_i32_0 = arith.constant 0 : i32
    %c0_i32_1 = arith.constant 0 : i32
    return %arg0, %c0_i32, %c0_i32_0 : i32, i32, i32
  }
  func.func @transform_1(%arg0: i32) -> (i32, i32) {
    %c0_i32 = arith.constant 0 : i32
    %c0_i32_0 = arith.constant 0 : i32
    %c0_i32_1 = arith.constant 0 : i32
    return %c0_i32, %c0_i32_0 : i32, i32
  }
  func.func @transform_2(%arg0: i32) -> (i32, i32) {
    %c0_i32 = arith.constant 0 : i32
    %c0_i32_0 = arith.constant 0 : i32
    %c0_i32_1 = arith.constant 0 : i32
    return %c0_i32, %c0_i32_0 : i32, i32
  }
  func.func @transform_3(%arg0: i32) -> (i32, i32) {
    %c0_i32 = arith.constant 0 : i32
    %c0_i32_0 = arith.constant 0 : i32
    %c0_i32_1 = arith.constant 0 : i32
    return %c0_i32, %c0_i32_0 : i32, i32
  }
  func.func @transform_4(%arg0: i32) -> (i32, i32) {
    %c0_i32 = arith.constant 0 : i32
    %c0_i32_0 = arith.constant 0 : i32
    %c0_i32_1 = arith.constant 0 : i32
    return %c0_i32, %c0_i32_0 : i32, i32
  }
  func.func @transform_5(%arg0: i32) -> (i32, i32) {
    %c0_i32 = arith.constant 0 : i32
    %c0_i32_0 = arith.constant 0 : i32
    %c0_i32_1 = arith.constant 0 : i32
    return %c0_i32, %c0_i32_0 : i32, i32
  }
  func.func @transform_6(%arg0: i32) -> (i32, i32) {
    %c0_i32 = arith.constant 0 : i32
    %c0_i32_0 = arith.constant 0 : i32
    %c0_i32_1 = arith.constant 0 : i32
    return %c0_i32, %c0_i32_0 : i32, i32
  }
  func.func @transform_7(%arg0: i32) -> (i32, i32) {
    %c0_i32 = arith.constant 0 : i32
    %c0_i32_0 = arith.constant 0 : i32
    return %arg0, %c0_i32 : i32, i32
  }
}

</mosaic_0001>

<llo_original>
// kernel: tpu_custom_call.1
$region0: #{tpu_custom_call.1}
  #allocation0 [shape = 'u32[]', space=smem, size = 0x4, offset = 0x4, fixed_abs, tag = 'smem constant byte address 0x4 - core index']
  #allocation1 [shape = 'u32[72,128]{1,0:T(1,128)}', space=vmem, size = 0x9000, scoped, tag = 'internal scratch']
  #allocation2 [shape = 'f32[136,32]{1,0:T(8,128)}', space=vmem, size = 0x11000, scoped, tag = 'scratch operand']
  #allocation3 [shape = 'f32[72,64]{1,0:T(8,128)}', space=vmem, size = 0x9000, scoped, tag = 'scratch operand']
  %s0 = inlined_call_operand.vmem [shape: f32[1,8,128], index: 0, kind: input, shape index: {}]
  %s1 = inlined_call_operand.vmem [shape: f32[3,32], index: 1, kind: input, shape index: {}]
  %s2 = inlined_call_operand.vmem [shape: f32[1,32], index: 2, kind: input, shape index: {}]
  %s3 = inlined_call_operand.vmem [shape: f32[96,64], index: 3, kind: input, shape index: {}]
  %s4 = inlined_call_operand.vmem [shape: f32[1,64], index: 4, kind: input, shape index: {}]
  %s5 = inlined_call_operand.hbm [shape: f32[192,128], index: 5, kind: input, shape index: {}]
  %s6 = inlined_call_operand.vmem [shape: f32[1,128], index: 6, kind: input, shape index: {}]
  %s7 = inlined_call_operand.hbm [shape: f32[16,128], index: 7, kind: output, shape index: {}]
  %s8 = sld [smem:[#allocation0]]
  $region42: #{tpu_custom_call.1} parent=0
    _
  %s10 = ssub.s32 1, %s8
  %s11 = scalar_select 0, %s10, %s8
  $region1: #{tpu_custom_call.1} parent=0
    #allocation4 [shape = 'u8[98304]{0}', space=vmem, size = 0x18000, scoped, tag = 'input window, operand 5, single buffered']
    #allocation5 [shape = 's32[1]{0}', space=sflag, size = 0x4, scoped, tag = 'scoped memory for tpu_custom_call.1']
    #allocation6 [shape = 's32[1]{0}', space=sflag, size = 0x4, scoped, tag = 'scoped memory for tpu_custom_call.1']
    #allocation7 [shape = 'u8[8192]{0}', space=vmem, size = 0x2000, scoped, tag = 'output window, operand 0, single buffered']
    %12 = vsyncpa [#allocation5], 0
    %13 = vsyncpa [#allocation6], 0
    // Predicated region
    $region2: #{tpu_custom_call.1} parent=1 // pred_check
      _
    $region3: #{tpu_custom_call.1} parent=1 // pred_check_branch
      %15 = sbr.rel (0) target = $region5
    $region4: #{tpu_custom_call.1} parent=1 // pred_region
      _
    $region5: #{tpu_custom_call.1} parent=1 // pred_fallthru
      _
    // Predicated region
    $region6: #{tpu_custom_call.1} parent=1 // pred_check
      _
    $region7: #{tpu_custom_call.1} parent=1 // pred_check_branch
      %17 = sbr.rel (0) target = $region9
    $region8: #{tpu_custom_call.1} parent=1 // pred_region
      _
    $region9: #{tpu_custom_call.1} parent=1 // pred_fallthru
      _
    // Predicated region
    $region10: #{tpu_custom_call.1} parent=1 // pred_check
      _
    $region11: #{tpu_custom_call.1} parent=1 // pred_check_branch
      %19 = sbr.rel (0) target = $region13
    $region12: #{tpu_custom_call.1} parent=1 // pred_region
      _
    $region13: #{tpu_custom_call.1} parent=1 // pred_fallthru
      _
    // Predicated region
    $region14: #{tpu_custom_call.1} parent=1 // pred_check
      _
    $region15: #{tpu_custom_call.1} parent=1 // pred_check_branch
      %21 = sbr.rel (0) target = $region17
    $region16: #{tpu_custom_call.1} parent=1 // pred_region
      _
    $region17: #{tpu_custom_call.1} parent=1 // pred_fallthru
      _
    // Predicated region
    $region18: #{tpu_custom_call.1} parent=1 // pred_check
      _
    $region19: #{tpu_custom_call.1} parent=1 // pred_check_branch
      %23 = sbr.rel (0) target = $region21
    $region20: #{tpu_custom_call.1} parent=1 // pred_region
      _
    $region21: #{tpu_custom_call.1} parent=1 // pred_fallthru
      _
    // Predicated region
    $region22: #{tpu_custom_call.1} parent=1 // pred_check
      _
    $region23: #{tpu_custom_call.1} parent=1 // pred_check_branch
      %25 = sbr.rel (0) target = $region25
    $region24: #{tpu_custom_call.1} parent=1 // pred_region
      %27 = vsyncadd [#allocation5], 0
      %s28 = sshll.u32 %s5, 4
      %s29 = int_to_ptr.hbm [resolvable:$true] %s28
      %s30 = sshll.u32 [#allocation4], 4
      %s31 = int_to_ptr.vmem [resolvable:$true] %s30
      %36 = dma.hbm_to_vmem [thread:$0]  %s29, 3072, %s31, [#allocation5], 128, 128, 8
    $region25: #{tpu_custom_call.1} parent=1 // pred_fallthru
      _
    // Predicated region
    $region26: #{tpu_custom_call.1} parent=1 // pred_check
      _
    $region27: #{tpu_custom_call.1} parent=1 // pred_check_branch
      %38 = sbr.rel (0) target = $region29
    $region28: #{tpu_custom_call.1} parent=1 // pred_region
      _
    $region29: #{tpu_custom_call.1} parent=1 // pred_fallthru
      _
    // Predicated region
    $region30: #{tpu_custom_call.1} parent=1 // pred_check
      _
    $region31: #{tpu_custom_call.1} parent=1 // pred_check_branch
      %40 = sbr.rel (0) target = $region33
    $region32: #{tpu_custom_call.1} parent=1 // pred_region
      %42 = dma.done [#allocation5], 3072
    $region33: #{tpu_custom_call.1} parent=1 // pred_fallthru
      _
    %v43 = vld [vmem:[%s0] sm:$0xff]
    %44 = vxpose.xlu0.b32.start [1/16] %v43, 128
    %45 = vxpose.xlu0.b32.cont [2/16] 0.0, 128
    %46 = vxpose.xlu0.b32.cont [3/16] 0.0, 128
    %47 = vxpose.xlu0.b32.cont [4/16] 0.0, 128
    %48 = vxpose.xlu0.b32.cont [5/16] 0.0, 128
    %49 = vxpose.xlu0.b32.cont [6/16] 0.0, 128
    %50 = vxpose.xlu0.b32.cont [7/16] 0.0, 128
    %51 = vxpose.xlu0.b32.cont [8/16] 0.0, 128
    %52 = vxpose.xlu0.b32.cont [9/16] 0.0, 128
    %53 = vxpose.xlu0.b32.cont [10/16] 0.0, 128
    %54 = vxpose.xlu0.b32.cont [11/16] 0.0, 128
    %55 = vxpose.xlu0.b32.cont [12/16] 0.0, 128
    %56 = vxpose.xlu0.b32.cont [13/16] 0.0, 128
    %57 = vxpose.xlu0.b32.cont [14/16] 0.0, 128
    %58 = vxpose.xlu0.b32.cont [15/16] 0.0, 128
    %59 = vxpose.xlu0.b32.end [16/16] 0.0, 128
    %v60 = vpop.trf.xlu0
    %v61 = vpop.trf.xlu0
    %v62 = vpop.trf.xlu0
    %v63 = vpop.trf.xlu0
    %v64 = vpop.trf.xlu0
    %v65 = vpop.trf.xlu0
    %v66 = vpop.trf.xlu0
    %v67 = vpop.trf.xlu0
    %v68 = vpop.trf.xlu0
    %v69 = vpop.trf.xlu0
    %v70 = vpop.trf.xlu0
    %v71 = vpop.trf.xlu0
    %v72 = vpop.trf.xlu0
    %v73 = vpop.trf.xlu0
    %v74 = vpop.trf.xlu0
    %v75 = vpop.trf.xlu0
    %v76 = vld [vmem:[%s1] sm:$0x7]
    %78 = vset.pattern.permute.xlu0 0
    %79 = vperm.xlu0 %78, %v60
    %v80 = vpop.permute.xlu0 %79
    %83 = vset.pattern.permute.xlu0 0
    %84 = vperm.xlu0 %83, %v61
    %v85 = vpop.permute.xlu0 %84
    %88 = vset.pattern.permute.xlu0 0
    %89 = vperm.xlu0 %88, %v62
    %v90 = vpop.permute.xlu0 %89
    %93 = vset.pattern.permute.xlu0 0
    %94 = vperm.xlu0 %93, %v63
    %v95 = vpop.permute.xlu0 %94
    %98 = vset.pattern.permute.xlu0 0
    %99 = vperm.xlu0 %98, %v64
    %v100 = vpop.permute.xlu0 %99
    %103 = vset.pattern.permute.xlu0 0
    %104 = vperm.xlu0 %103, %v65
    %v105 = vpop.permute.xlu0 %104
    %108 = vset.pattern.permute.xlu0 0
    %109 = vperm.xlu0 %108, %v66
    %v110 = vpop.permute.xlu0 %109
    %113 = vset.pattern.permute.xlu0 0
    %114 = vperm.xlu0 %113, %v67
    %v115 = vpop.permute.xlu0 %114
    %118 = vset.pattern.permute.xlu0 0
    %119 = vperm.xlu0 %118, %v68
    %v120 = vpop.permute.xlu0 %119
    %123 = vset.pattern.permute.xlu0 0
    %124 = vperm.xlu0 %123, %v69
    %v125 = vpop.permute.xlu0 %124
    %128 = vset.pattern.permute.xlu0 0
    %129 = vperm.xlu0 %128, %v70
    %v130 = vpop.permute.xlu0 %129
    %133 = vset.pattern.permute.xlu0 0
    %134 = vperm.xlu0 %133, %v71
    %v135 = vpop.permute.xlu0 %134
    %138 = vset.pattern.permute.xlu0 0
    %139 = vperm.xlu0 %138, %v72
    %v140 = vpop.permute.xlu0 %139
    %143 = vset.pattern.permute.xlu0 0
    %144 = vperm.xlu0 %143, %v73
    %v145 = vpop.permute.xlu0 %144
    %148 = vset.pattern.permute.xlu0 0
    %149 = vperm.xlu0 %148, %v74
    %v150 = vpop.permute.xlu0 %149
    %153 = vset.pattern.permute.xlu0 0
    %154 = vperm.xlu0 %153, %v75
    %v155 = vpop.permute.xlu0 %154
    %v157 = vperm.slane %v76, 0
    %v158 = vmul.f32 %v80, %v157
    %v159 = vmul.f32 %v85, %v157
    %v160 = vmul.f32 %v90, %v157
    %v161 = vmul.f32 %v95, %v157
    %v162 = vmul.f32 %v100, %v157
    %v163 = vmul.f32 %v105, %v157
    %v164 = vmul.f32 %v110, %v157
    %v165 = vmul.f32 %v115, %v157
    %v166 = vmul.f32 %v120, %v157
    %v167 = vmul.f32 %v125, %v157
    %v168 = vmul.f32 %v130, %v157
    %v169 = vmul.f32 %v135, %v157
    %v170 = vmul.f32 %v140, %v157
    %v171 = vmul.f32 %v145, %v157
    %v172 = vmul.f32 %v150, %v157
    %v173 = vmul.f32 %v155, %v157
    %174 = vset.pattern.permute.xlu0 1
    %175 = vperm.xlu0 %174, %v60
    %v176 = vpop.permute.xlu0 %175
    %178 = vset.pattern.permute.xlu0 1
    %179 = vperm.xlu0 %178, %v61
    %v180 = vpop.permute.xlu0 %179
    %182 = vset.pattern.permute.xlu0 1
    %183 = vperm.xlu0 %182, %v62
    %v184 = vpop.permute.xlu0 %183
    %186 = vset.pattern.permute.xlu0 1
    %187 = vperm.xlu0 %186, %v63
    %v188 = vpop.permute.xlu0 %187
    %190 = vset.pattern.permute.xlu0 1
    %191 = vperm.xlu0 %190, %v64
    %v192 = vpop.permute.xlu0 %191
    %194 = vset.pattern.permute.xlu0 1
    %195 = vperm.xlu0 %194, %v65
    %v196 = vpop.permute.xlu0 %195
    %198 = vset.pattern.permute.xlu0 1
    %199 = vperm.xlu0 %198, %v66
    %v200 = vpop.permute.xlu0 %199
    %202 = vset.pattern.permute.xlu0 1
    %203 = vperm.xlu0 %202, %v67
    %v204 = vpop.permute.xlu0 %203
    %206 = vset.pattern.permute.xlu0 1
    %207 = vperm.xlu0 %206, %v68
    %v208 = vpop.permute.xlu0 %207
    %210 = vset.pattern.permute.xlu0 1
    %211 = vperm.xlu0 %210, %v69
    %v212 = vpop.permute.xlu0 %211
    %214 = vset.pattern.permute.xlu0 1
    %215 = vperm.xlu0 %214, %v70
    %v216 = vpop.permute.xlu0 %215
    %218 = vset.pattern.permute.xlu0 1
    %219 = vperm.xlu0 %218, %v71
    %v220 = vpop.permute.xlu0 %219
    %222 = vset.pattern.permute.xlu0 1
    %223 = vperm.xlu0 %222, %v72
    %v224 = vpop.permute.xlu0 %223
    %226 = vset.pattern.permute.xlu0 1
    %227 = vperm.xlu0 %226, %v73
    %v228 = vpop.permute.xlu0 %227
    %230 = vset.pattern.permute.xlu0 1
    %231 = vperm.xlu0 %230, %v74
    %v232 = vpop.permute.xlu0 %231
    %234 = vset.pattern.permute.xlu0 1
    %235 = vperm.xlu0 %234, %v75
    %v236 = vpop.permute.xlu0 %235
    %v238 = vperm.slane %v76, 1
    %v239 = vmul.f32 %v176, %v238
    %v240 = vmul.f32 %v180, %v238
    %v241 = vmul.f32 %v184, %v238
    %v242 = vmul.f32 %v188, %v238
    %v243 = vmul.f32 %v192, %v238
    %v244 = vmul.f32 %v196, %v238
    %v245 = vmul.f32 %v200, %v238
    %v246 = vmul.f32 %v204, %v238
    %v247 = vmul.f32 %v208, %v238
    %v248 = vmul.f32 %v212, %v238
    %v249 = vmul.f32 %v216, %v238
    %v250 = vmul.f32 %v220, %v238
    %v251 = vmul.f32 %v224, %v238
    %v252 = vmul.f32 %v228, %v238
    %v253 = vmul.f32 %v232, %v238
    %v254 = vmul.f32 %v236, %v238
    %v255 = vadd.f32 %v158, %v239
    %v256 = vadd.f32 %v159, %v240
    %v257 = vadd.f32 %v160, %v241
    %v258 = vadd.f32 %v161, %v242
    %v259 = vadd.f32 %v162, %v243
    %v260 = vadd.f32 %v163, %v244
    %v261 = vadd.f32 %v164, %v245
    %v262 = vadd.f32 %v165, %v246
    %v263 = vadd.f32 %v166, %v247
    %v264 = vadd.f32 %v167, %v248
    %v265 = vadd.f32 %v168, %v249
    %v266 = vadd.f32 %v169, %v250
    %v267 = vadd.f32 %v170, %v251
    %v268 = vadd.f32 %v171, %v252
    %v269 = vadd.f32 %v172, %v253
    %v270 = vadd.f32 %v173, %v254
    %271 = vset.pattern.permute.xlu0 2
    %272 = vperm.xlu0 %271, %v60
    %v273 = vpop.permute.xlu0 %272
    %275 = vset.pattern.permute.xlu0 2
    %276 = vperm.xlu0 %275, %v61
    %v277 = vpop.permute.xlu0 %276
    %279 = vset.pattern.permute.xlu0 2
    %280 = vperm.xlu0 %279, %v62
    %v281 = vpop.permute.xlu0 %280
    %283 = vset.pattern.permute.xlu0 2
    %284 = vperm.xlu0 %283, %v63
    %v285 = vpop.permute.xlu0 %284
    %287 = vset.pattern.permute.xlu0 2
    %288 = vperm.xlu0 %287, %v64
    %v289 = vpop.permute.xlu0 %288
    %291 = vset.pattern.permute.xlu0 2
    %292 = vperm.xlu0 %291, %v65
    %v293 = vpop.permute.xlu0 %292
    %295 = vset.pattern.permute.xlu0 2
    %296 = vperm.xlu0 %295, %v66
    %v297 = vpop.permute.xlu0 %296
    %299 = vset.pattern.permute.xlu0 2
    %300 = vperm.xlu0 %299, %v67
    %v301 = vpop.permute.xlu0 %300
    %303 = vset.pattern.permute.xlu0 2
    %304 = vperm.xlu0 %303, %v68
    %v305 = vpop.permute.xlu0 %304
    %307 = vset.pattern.permute.xlu0 2
    %308 = vperm.xlu0 %307, %v69
    %v309 = vpop.permute.xlu0 %308
    %311 = vset.pattern.permute.xlu0 2
    %312 = vperm.xlu0 %311, %v70
    %v313 = vpop.permute.xlu0 %312
    %315 = vset.pattern.permute.xlu0 2
    %316 = vperm.xlu0 %315, %v71
    %v317 = vpop.permute.xlu0 %316
    %319 = vset.pattern.permute.xlu0 2
    %320 = vperm.xlu0 %319, %v72
    %v321 = vpop.permute.xlu0 %320
    %323 = vset.pattern.permute.xlu0 2
    %324 = vperm.xlu0 %323, %v73
    %v325 = vpop.permute.xlu0 %324
    %327 = vset.pattern.permute.xlu0 2
    %328 = vperm.xlu0 %327, %v74
    %v329 = vpop.permute.xlu0 %328
    %331 = vset.pattern.permute.xlu0 2
    %332 = vperm.xlu0 %331, %v75
    %v333 = vpop.permute.xlu0 %332
    %v335 = vperm.slane %v76, 2
    %v336 = vmul.f32 %v273, %v335
    %v337 = vmul.f32 %v277, %v335
    %v338 = vmul.f32 %v281, %v335
    %v339 = vmul.f32 %v285, %v335
    %v340 = vmul.f32 %v289, %v335
    %v341 = vmul.f32 %v293, %v335
    %v342 = vmul.f32 %v297, %v335
    %v343 = vmul.f32 %v301, %v335
    %v344 = vmul.f32 %v305, %v335
    %v345 = vmul.f32 %v309, %v335
    %v346 = vmul.f32 %v313, %v335
    %v347 = vmul.f32 %v317, %v335
    %v348 = vmul.f32 %v321, %v335
    %v349 = vmul.f32 %v325, %v335
    %v350 = vmul.f32 %v329, %v335
    %v351 = vmul.f32 %v333, %v335
    %v352 = vadd.f32 %v255, %v336
    %v353 = vadd.f32 %v256, %v337
    %v354 = vadd.f32 %v257, %v338
    %v355 = vadd.f32 %v258, %v339
    %v356 = vadd.f32 %v259, %v340
    %v357 = vadd.f32 %v260, %v341
    %v358 = vadd.f32 %v261, %v342
    %v359 = vadd.f32 %v262, %v343
    %v360 = vadd.f32 %v263, %v344
    %v361 = vadd.f32 %v264, %v345
    %v362 = vadd.f32 %v265, %v346
    %v363 = vadd.f32 %v266, %v347
    %v364 = vadd.f32 %v267, %v348
    %v365 = vadd.f32 %v268, %v349
    %v366 = vadd.f32 %v269, %v350
    %v367 = vadd.f32 %v270, %v351
    %v368 = vld [vmem:[%s2] sm:$0x1]
    %v370 = vperm.slane %v368, 0
    %v372 = vadd.f32 %v352, %v370
    %v373 = vadd.f32 %v353, %v370
    %v374 = vadd.f32 %v354, %v370
    %v375 = vadd.f32 %v355, %v370
    %v376 = vadd.f32 %v356, %v370
    %v377 = vadd.f32 %v357, %v370
    %v378 = vadd.f32 %v358, %v370
    %v379 = vadd.f32 %v359, %v370
    %v380 = vadd.f32 %v360, %v370
    %v381 = vadd.f32 %v361, %v370
    %v382 = vadd.f32 %v362, %v370
    %v383 = vadd.f32 %v363, %v370
    %v384 = vadd.f32 %v364, %v370
    %v385 = vadd.f32 %v365, %v370
    %v386 = vadd.f32 %v366, %v370
    %v387 = vadd.f32 %v367, %v370
    %v388 = vmax.f32 %v372, 0.0
    %v389 = vmax.f32 %v373, 0.0
    %v390 = vmax.f32 %v374, 0.0
    %v391 = vmax.f32 %v375, 0.0
    %v392 = vmax.f32 %v376, 0.0
    %v393 = vmax.f32 %v377, 0.0
    %v394 = vmax.f32 %v378, 0.0
    %v395 = vmax.f32 %v379, 0.0
    %v396 = vmax.f32 %v380, 0.0
    %v397 = vmax.f32 %v381, 0.0
    %v398 = vmax.f32 %v382, 0.0
    %v399 = vmax.f32 %v383, 0.0
    %v400 = vmax.f32 %v384, 0.0
    %v401 = vmax.f32 %v385, 0.0
    %v402 = vmax.f32 %v386, 0.0
    %v403 = vmax.f32 %v387, 0.0
    %vm404 = vcmask 261120
    %405 = vst.msk [vmem:[#allocation2] sm:$0xff] %vm404, %v388
    %406 = vst.msk [vmem:[#allocation2 + $0x8] sm:$0xff] %vm404, %v389
    %407 = vst.msk [vmem:[#allocation2 + $0x10] sm:$0xff] %vm404, %v390
    %408 = vst.msk [vmem:[#allocation2 + $0x18] sm:$0xff] %vm404, %v391
    %409 = vst.msk [vmem:[#allocation2 + $0x20] sm:$0xff] %vm404, %v392
    %410 = vst.msk [vmem:[#allocation2 + $0x28] sm:$0xff] %vm404, %v393
    %411 = vst.msk [vmem:[#allocation2 + $0x30] sm:$0xff] %vm404, %v394
    %412 = vst.msk [vmem:[#allocation2 + $0x38] sm:$0xff] %vm404, %v395
    %413 = vst.msk [vmem:[#allocation2 + $0x40] sm:$0xff] %vm404, %v396
    %414 = vst.msk [vmem:[#allocation2 + $0x48] sm:$0xff] %vm404, %v397
    %415 = vst.msk [vmem:[#allocation2 + $0x50] sm:$0xff] %vm404, %v398
    %416 = vst.msk [vmem:[#allocation2 + $0x58] sm:$0xff] %vm404, %v399
    %417 = vst.msk [vmem:[#allocation2 + $0x60] sm:$0xff] %vm404, %v400
    %418 = vst.msk [vmem:[#allocation2 + $0x68] sm:$0xff] %vm404, %v401
    %419 = vst.msk [vmem:[#allocation2 + $0x70] sm:$0xff] %vm404, %v402
    %420 = vst.msk [vmem:[#allocation2 + $0x78] sm:$0xff] %vm404, %v403
    %v421 = vld [vmem:[#allocation2] ss:$2 sm:$0xff]
    %s422 = scalar_lea.vmem [#allocation2], 16
    %v423 = vld [vmem:[%s422] ss:$2 sm:$0xff]
    %s424 = scalar_lea.vmem [#allocation2], 32
    %v425 = vld [vmem:[%s424] ss:$2 sm:$0xff]
    %s426 = scalar_lea.vmem [#allocation2], 48
    %v427 = vld [vmem:[%s426] ss:$2 sm:$0xff]
    %s428 = scalar_lea.vmem [#allocation2], 64
    %v429 = vld [vmem:[%s428] ss:$2 sm:$0xff]
    %s430 = scalar_lea.vmem [#allocation2], 80
    %v431 = vld [vmem:[%s430] ss:$2 sm:$0xff]
    %s432 = scalar_lea.vmem [#allocation2], 96
    %v433 = vld [vmem:[%s432] ss:$2 sm:$0xff]
    %s434 = scalar_lea.vmem [#allocation2], 112
    %v435 = vld [vmem:[%s434] ss:$2 sm:$0xff]
    %s436 = scalar_lea.vmem [#allocation2], 1
    %v437 = vld [vmem:[%s436] ss:$2 sm:$0xff]
    %s438 = scalar_lea.vmem [#allocation2], 17
    %v439 = vld [vmem:[%s438] ss:$2 sm:$0xff]
    %s440 = scalar_lea.vmem [#allocation2], 33
    %v441 = vld [vmem:[%s440] ss:$2 sm:$0xff]
    %s442 = scalar_lea.vmem [#allocation2], 49
    %v443 = vld [vmem:[%s442] ss:$2 sm:$0xff]
    %s444 = scalar_lea.vmem [#allocation2], 65
    %v445 = vld [vmem:[%s444] ss:$2 sm:$0xff]
    %s446 = scalar_lea.vmem [#allocation2], 81
    %v447 = vld [vmem:[%s446] ss:$2 sm:$0xff]
    %s448 = scalar_lea.vmem [#allocation2], 97
    %v449 = vld [vmem:[%s448] ss:$2 sm:$0xff]
    %s450 = scalar_lea.vmem [#allocation2], 113
    %v451 = vld [vmem:[%s450] ss:$2 sm:$0xff]
    %v452 = vmax.f32 %v421, %v437
    %v453 = vmax.f32 %v423, %v439
    %v454 = vmax.f32 %v425, %v441
    %v455 = vmax.f32 %v427, %v443
    %v456 = vmax.f32 %v429, %v445
    %v457 = vmax.f32 %v431, %v447
    %v458 = vmax.f32 %v433, %v449
    %v459 = vmax.f32 %v435, %v451
    %v460 = vld [vmem:[%s3] sm:$0xff]
    %v461 = vld [vmem:[%s3 + $0x8] sm:$0xff]
    %v462 = vld [vmem:[%s3 + $0x10] sm:$0xff]
    %v463 = vld [vmem:[%s3 + $0x18] sm:$0xff]
    %s464 = scalar_lea.vmem [#allocation2], 2
    %v465 = vld [vmem:[%s464] ss:$2 sm:$0xff]
    %s466 = scalar_lea.vmem [#allocation2], 18
    %v467 = vld [vmem:[%s466] ss:$2 sm:$0xff]
    %s468 = scalar_lea.vmem [#allocation2], 34
    %v469 = vld [vmem:[%s468] ss:$2 sm:$0xff]
    %s470 = scalar_lea.vmem [#allocation2], 50
    %v471 = vld [vmem:[%s470] ss:$2 sm:$0xff]
    %s472 = scalar_lea.vmem [#allocation2], 66
    %v473 = vld [vmem:[%s472] ss:$2 sm:$0xff]
    %s474 = scalar_lea.vmem [#allocation2], 82
    %v475 = vld [vmem:[%s474] ss:$2 sm:$0xff]
    %s476 = scalar_lea.vmem [#allocation2], 98
    %v477 = vld [vmem:[%s476] ss:$2 sm:$0xff]
    %s478 = scalar_lea.vmem [#allocation2], 114
    %v479 = vld [vmem:[%s478] ss:$2 sm:$0xff]
    %s480 = scalar_lea.vmem [#allocation2], 3
    %v481 = vld [vmem:[%s480] ss:$2 sm:$0xff]
    %s482 = scalar_lea.vmem [#allocation2], 19
    %v483 = vld [vmem:[%s482] ss:$2 sm:$0xff]
    %s484 = scalar_lea.vmem [#allocation2], 35
    %v485 = vld [vmem:[%s484] ss:$2 sm:$0xff]
    %s486 = scalar_lea.vmem [#allocation2], 51
    %v487 = vld [vmem:[%s486] ss:$2 sm:$0xff]
    %s488 = scalar_lea.vmem [#allocation2], 67
    %v489 = vld [vmem:[%s488] ss:$2 sm:$0xff]
    %s490 = scalar_lea.vmem [#allocation2], 83
    %v491 = vld [vmem:[%s490] ss:$2 sm:$0xff]
    %s492 = scalar_lea.vmem [#allocation2], 99
    %v493 = vld [vmem:[%s492] ss:$2 sm:$0xff]
    %s494 = scalar_lea.vmem [#allocation2], 115
    %v495 = vld [vmem:[%s494] ss:$2 sm:$0xff]
    %v496 = vmax.f32 %v465, %v481
    %v497 = vmax.f32 %v467, %v483
    %v498 = vmax.f32 %v469, %v485
    %v499 = vmax.f32 %v471, %v487
    %v500 = vmax.f32 %v473, %v489
    %v501 = vmax.f32 %v475, %v491
    %v502 = vmax.f32 %v477, %v493
    %v503 = vmax.f32 %v479, %v495
    %v504 = vld [vmem:[%s3 + $0x20] sm:$0xff]
    %v505 = vld [vmem:[%s3 + $0x28] sm:$0xff]
    %v506 = vld [vmem:[%s3 + $0x30] sm:$0xff]
    %v507 = vld [vmem:[%s3 + $0x38] sm:$0xff]
    %v509 = vsel %vm404, %v496, 0
    %v512 = vsel %vm404, %v497, 0
    %v515 = vsel %vm404, %v498, 0
    %v518 = vsel %vm404, %v499, 0
    %v521 = vsel %vm404, %v500, 0
    %v524 = vsel %vm404, %v501, 0
    %v527 = vsel %vm404, %v502, 0
    %v530 = vsel %vm404, %v503, 0
    %532 = vmatpush.msra.mxu0 0.0
    %533 = vmatpush.msra.mxu0 0.0
    %534 = vmatpush.msra.mxu0 0.0
    %535 = vmatpush.msra.mxu0 0.0
    %536 = vmatpush.msra.mxu0 0.0
    %537 = vmatpush.msra.mxu0 0.0
    %538 = vmatpush.msra.mxu0 0.0
    %539 = vmatpush.msra.mxu0 0.0
    %540 = vmatpush.msra.mxu0 0.0
    %541 = vmatpush.msra.mxu0 0.0
    %542 = vmatpush.msra.mxu0 0.0
    %543 = vmatpush.msra.mxu0 0.0
    %544 = vmatpush.msra.mxu0 %v507
    %545 = vmatpush.msra.mxu0 %v506
    %546 = vmatpush.msra.mxu0 %v505
    %547 = vmatpush.msra.mxu0 %v504
    %548 = vmatmul.f32.gmra.mxu0 %v509
    %v549 = vpop.f32.mrf.mxu0
    %v550 = vadd.f32 0.0, %v549
    %551 = vmatmul.f32.gmra.mxu0 %v512
    %v552 = vpop.f32.mrf.mxu0
    %v553 = vadd.f32 0.0, %v552
    %554 = vmatmul.f32.gmra.mxu0 %v515
    %v555 = vpop.f32.mrf.mxu0
    %v556 = vadd.f32 0.0, %v555
    %557 = vmatmul.f32.gmra.mxu0 %v518
    %v558 = vpop.f32.mrf.mxu0
    %v559 = vadd.f32 0.0, %v558
    %560 = vmatmul.f32.gmra.mxu0 %v521
    %v561 = vpop.f32.mrf.mxu0
    %v562 = vadd.f32 0.0, %v561
    %563 = vmatmul.f32.gmra.mxu0 %v524
    %v564 = vpop.f32.mrf.mxu0
    %v565 = vadd.f32 0.0, %v564
    %566 = vmatmul.f32.gmra.mxu0 %v527
    %v567 = vpop.f32.mrf.mxu0
    %v568 = vadd.f32 0.0, %v567
    %569 = vmatmul.f32.gmra.mxu0 %v530
    %v570 = vpop.f32.mrf.mxu0
    %v571 = vadd.f32 0.0, %v570
    %572 = vdwg.mxu0
    %v574 = vsel %vm404, %v452, 0
    %v577 = vsel %vm404, %v453, 0
    %v580 = vsel %vm404, %v454, 0
    %v583 = vsel %vm404, %v455, 0
    %v586 = vsel %vm404, %v456, 0
    %v589 = vsel %vm404, %v457, 0
    %v592 = vsel %vm404, %v458, 0
    %v595 = vsel %vm404, %v459, 0
    %597 = vmatpush.msra.mxu0 0.0
    %598 = vmatpush.msra.mxu0 0.0
    %599 = vmatpush.msra.mxu0 0.0
    %600 = vmatpush.msra.mxu0 0.0
    %601 = vmatpush.msra.mxu0 0.0
    %602 = vmatpush.msra.mxu0 0.0
    %603 = vmatpush.msra.mxu0 0.0
    %604 = vmatpush.msra.mxu0 0.0
    %605 = vmatpush.msra.mxu0 0.0
    %606 = vmatpush.msra.mxu0 0.0
    %607 = vmatpush.msra.mxu0 0.0
    %608 = vmatpush.msra.mxu0 0.0
    %609 = vmatpush.msra.mxu0 %v463
    %610 = vmatpush.msra.mxu0 %v462
    %611 = vmatpush.msra.mxu0 %v461
    %612 = vmatpush.msra.mxu0 %v460
    %613 = vmatmul.f32.gmra.mxu0 %v574
    %v614 = vpop.f32.mrf.mxu0
    %v615 = vadd.f32 %v550, %v614
    %616 = vmatmul.f32.gmra.mxu0 %v577
    %v617 = vpop.f32.mrf.mxu0
    %v618 = vadd.f32 %v553, %v617
    %619 = vmatmul.f32.gmra.mxu0 %v580
    %v620 = vpop.f32.mrf.mxu0
    %v621 = vadd.f32 %v556, %v620
    %622 = vmatmul.f32.gmra.mxu0 %v583
    %v623 = vpop.f32.mrf.mxu0
    %v624 = vadd.f32 %v559, %v623
    %625 = vmatmul.f32.gmra.mxu0 %v586
    %v626 = vpop.f32.mrf.mxu0
    %v627 = vadd.f32 %v562, %v626
    %628 = vmatmul.f32.gmra.mxu0 %v589
    %v629 = vpop.f32.mrf.mxu0
    %v630 = vadd.f32 %v565, %v629
    %631 = vmatmul.f32.gmra.mxu0 %v592
    %v632 = vpop.f32.mrf.mxu0
    %v633 = vadd.f32 %v568, %v632
    %634 = vmatmul.f32.gmra.mxu0 %v595
    %v635 = vpop.f32.mrf.mxu0
    %v636 = vadd.f32 %v571, %v635
    %637 = vdwg.mxu0
    %s638 = scalar_lea.vmem [#allocation2], 4
    %v639 = vld [vmem:[%s638] ss:$2 sm:$0xff]
    %s640 = scalar_lea.vmem [#allocation2], 20
    %v641 = vld [vmem:[%s640] ss:$2 sm:$0xff]
    %s642 = scalar_lea.vmem [#allocation2], 36
    %v643 = vld [vmem:[%s642] ss:$2 sm:$0xff]
    %s644 = scalar_lea.vmem [#allocation2], 52
    %v645 = vld [vmem:[%s644] ss:$2 sm:$0xff]
    %s646 = scalar_lea.vmem [#allocation2], 68
    %v647 = vld [vmem:[%s646] ss:$2 sm:$0xff]
    %s648 = scalar_lea.vmem [#allocation2], 84
    %v649 = vld [vmem:[%s648] ss:$2 sm:$0xff]
    %s650 = scalar_lea.vmem [#allocation2], 100
    %v651 = vld [vmem:[%s650] ss:$2 sm:$0xff]
    %s652 = scalar_lea.vmem [#allocation2], 116
    %v653 = vld [vmem:[%s652] ss:$2 sm:$0xff]
    %s654 = scalar_lea.vmem [#allocation2], 5
    %v655 = vld [vmem:[%s654] ss:$2 sm:$0xff]
    %s656 = scalar_lea.vmem [#allocation2], 21
    %v657 = vld [vmem:[%s656] ss:$2 sm:$0xff]
    %s658 = scalar_lea.vmem [#allocation2], 37
    %v659 = vld [vmem:[%s658] ss:$2 sm:$0xff]
    %s660 = scalar_lea.vmem [#allocation2], 53
    %v661 = vld [vmem:[%s660] ss:$2 sm:$0xff]
    %s662 = scalar_lea.vmem [#allocation2], 69
    %v663 = vld [vmem:[%s662] ss:$2 sm:$0xff]
    %s664 = scalar_lea.vmem [#allocation2], 85
    %v665 = vld [vmem:[%s664] ss:$2 sm:$0xff]
    %s666 = scalar_lea.vmem [#allocation2], 101
    %v667 = vld [vmem:[%s666] ss:$2 sm:$0xff]
    %s668 = scalar_lea.vmem [#allocation2], 117
    %v669 = vld [vmem:[%s668] ss:$2 sm:$0xff]
    %v670 = vmax.f32 %v639, %v655
    %v671 = vmax.f32 %v641, %v657
    %v672 = vmax.f32 %v643, %v659
    %v673 = vmax.f32 %v645, %v661
    %v674 = vmax.f32 %v647, %v663
    %v675 = vmax.f32 %v649, %v665
    %v676 = vmax.f32 %v651, %v667
    %v677 = vmax.f32 %v653, %v669
    %v678 = vld [vmem:[%s3 + $0x40] sm:$0xff]
    %v679 = vld [vmem:[%s3 + $0x48] sm:$0xff]
    %v680 = vld [vmem:[%s3 + $0x50] sm:$0xff]
    %v681 = vld [vmem:[%s3 + $0x58] sm:$0xff]
    %v683 = vsel %vm404, %v670, 0
    %v686 = vsel %vm404, %v671, 0
    %v689 = vsel %vm404, %v672, 0
    %v692 = vsel %vm404, %v673, 0
    %v695 = vsel %vm404, %v674, 0
    %v698 = vsel %vm404, %v675, 0
    %v701 = vsel %vm404, %v676, 0
    %v704 = vsel %vm404, %v677, 0
    %706 = vmatpush.msra.mxu0 0.0
    %707 = vmatpush.msra.mxu0 0.0
    %708 = vmatpush.msra.mxu0 0.0
    %709 = vmatpush.msra.mxu0 0.0
    %710 = vmatpush.msra.mxu0 0.0
    %711 = vmatpush.msra.mxu0 0.0
    %712 = vmatpush.msra.mxu0 0.0
    %713 = vmatpush.msra.mxu0 0.0
    %714 = vmatpush.msra.mxu0 0.0
    %715 = vmatpush.msra.mxu0 0.0
    %716 = vmatpush.msra.mxu0 0.0
    %717 = vmatpush.msra.mxu0 0.0
    %718 = vmatpush.msra.mxu0 %v681
    %719 = vmatpush.msra.mxu0 %v680
    %720 = vmatpush.msra.mxu0 %v679
    %721 = vmatpush.msra.mxu0 %v678
    %722 = vmatmul.f32.gmra.mxu0 %v683
    %v723 = vpop.f32.mrf.mxu0
    %v724 = vadd.f32 0.0, %v723
    %725 = vmatmul.f32.gmra.mxu0 %v686
    %v726 = vpop.f32.mrf.mxu0
    %v727 = vadd.f32 0.0, %v726
    %728 = vmatmul.f32.gmra.mxu0 %v689
    %v729 = vpop.f32.mrf.mxu0
    %v730 = vadd.f32 0.0, %v729
    %731 = vmatmul.f32.gmra.mxu0 %v692
    %v732 = vpop.f32.mrf.mxu0
    %v733 = vadd.f32 0.0, %v732
    %734 = vmatmul.f32.gmra.mxu0 %v695
    %v735 = vpop.f32.mrf.mxu0
    %v736 = vadd.f32 0.0, %v735
    %737 = vmatmul.f32.gmra.mxu0 %v698
    %v738 = vpop.f32.mrf.mxu0
    %v739 = vadd.f32 0.0, %v738
    %740 = vmatmul.f32.gmra.mxu0 %v701
    %v741 = vpop.f32.mrf.mxu0
    %v742 = vadd.f32 0.0, %v741
    %743 = vmatmul.f32.gmra.mxu0 %v704
    %v744 = vpop.f32.mrf.mxu0
    %v745 = vadd.f32 0.0, %v744
    %746 = vdwg.mxu0
    %v747 = vadd.f32 %v615, %v724
    %v748 = vadd.f32 %v618, %v727
    %v749 = vadd.f32 %v621, %v730
    %v750 = vadd.f32 %v624, %v733
    %v751 = vadd.f32 %v627, %v736
    %v752 = vadd.f32 %v630, %v739
    %v753 = vadd.f32 %v633, %v742
    %v754 = vadd.f32 %v636, %v745
    %v755 = vld [vmem:[%s4] sm:$0x1]
    %v757 = vperm.slane %v755, 0
    %v759 = vadd.f32 %v747, %v757
    %v760 = vadd.f32 %v748, %v757
    %v761 = vadd.f32 %v749, %v757
    %v762 = vadd.f32 %v750, %v757
    %v763 = vadd.f32 %v751, %v757
    %v764 = vadd.f32 %v752, %v757
    %v765 = vadd.f32 %v753, %v757
    %v766 = vadd.f32 %v754, %v757
    %v767 = vmax.f32 %v759, 0.0
    %v768 = vmax.f32 %v760, 0.0
    %v769 = vmax.f32 %v761, 0.0
    %v770 = vmax.f32 %v762, 0.0
    %v771 = vmax.f32 %v763, 0.0
    %v772 = vmax.f32 %v764, 0.0
    %v773 = vmax.f32 %v765, 0.0
    %v774 = vmax.f32 %v766, 0.0
    %vm775 = vcmask 523264
    %776 = vst.msk [vmem:[#allocation3] sm:$0xff] %vm775, %v767
    %777 = vst.msk [vmem:[#allocation3 + $0x8] sm:$0xff] %vm775, %v768
    %778 = vst.msk [vmem:[#allocation3 + $0x10] sm:$0xff] %vm775, %v769
    %779 = vst.msk [vmem:[#allocation3 + $0x18] sm:$0xff] %vm775, %v770
    %780 = vst.msk [vmem:[#allocation3 + $0x20] sm:$0xff] %vm775, %v771
    %781 = vst.msk [vmem:[#allocation3 + $0x28] sm:$0xff] %vm775, %v772
    %782 = vst.msk [vmem:[#allocation3 + $0x30] sm:$0xff] %vm775, %v773
    %783 = vst.msk [vmem:[#allocation3 + $0x38] sm:$0xff] %vm775, %v774
    %v784 = vld [vmem:[#allocation3] ss:$4 sm:$0xff]
    %s785 = scalar_lea.vmem [#allocation3], 32
    %v786 = vld [vmem:[%s785] ss:$4 sm:$0xff]
    %s787 = scalar_lea.vmem [#allocation3], 1
    %v788 = vld [vmem:[%s787] ss:$4 sm:$0xff]
    %s789 = scalar_lea.vmem [#allocation3], 33
    %v790 = vld [vmem:[%s789] ss:$4 sm:$0xff]
    %v791 = vmax.f32 %v784, %v788
    %v792 = vmax.f32 %v786, %v790
    %v793 = vld [vmem:[#allocation4] sm:$0xff]
    %v794 = vld [vmem:[#allocation4 + $0x8] sm:$0xff]
    %v795 = vld [vmem:[#allocation4 + $0x10] sm:$0xff]
    %v796 = vld [vmem:[#allocation4 + $0x18] sm:$0xff]
    %v797 = vld [vmem:[#allocation4 + $0x20] sm:$0xff]
    %v798 = vld [vmem:[#allocation4 + $0x28] sm:$0xff]
    %v799 = vld [vmem:[#allocation4 + $0x30] sm:$0xff]
    %v800 = vld [vmem:[#allocation4 + $0x38] sm:$0xff]
    %s801 = scalar_lea.vmem [#allocation3], 2
    %v802 = vld [vmem:[%s801] ss:$4 sm:$0xff]
    %s803 = scalar_lea.vmem [#allocation3], 34
    %v804 = vld [vmem:[%s803] ss:$4 sm:$0xff]
    %s805 = scalar_lea.vmem [#allocation3], 3
    %v806 = vld [vmem:[%s805] ss:$4 sm:$0xff]
    %s807 = scalar_lea.vmem [#allocation3], 35
    %v808 = vld [vmem:[%s807] ss:$4 sm:$0xff]
    %v809 = vmax.f32 %v802, %v806
    %v810 = vmax.f32 %v804, %v808
    %v811 = vld [vmem:[#allocation4 + $0x40] sm:$0xff]
    %v812 = vld [vmem:[#allocation4 + $0x48] sm:$0xff]
    %v813 = vld [vmem:[#allocation4 + $0x50] sm:$0xff]
    %v814 = vld [vmem:[#allocation4 + $0x58] sm:$0xff]
    %v815 = vld [vmem:[#allocation4 + $0x60] sm:$0xff]
    %v816 = vld [vmem:[#allocation4 + $0x68] sm:$0xff]
    %v817 = vld [vmem:[#allocation4 + $0x70] sm:$0xff]
    %v818 = vld [vmem:[#allocation4 + $0x78] sm:$0xff]
    %v820 = vsel %vm775, %v809, 0
    %v823 = vsel %vm775, %v810, 0
    %825 = vmatpush.msra.mxu0 0.0
    %826 = vmatpush.msra.mxu0 0.0
    %827 = vmatpush.msra.mxu0 0.0
    %828 = vmatpush.msra.mxu0 0.0
    %829 = vmatpush.msra.mxu0 0.0
    %830 = vmatpush.msra.mxu0 0.0
    %831 = vmatpush.msra.mxu0 0.0
    %832 = vmatpush.msra.mxu0 0.0
    %833 = vmatpush.msra.mxu0 %v818
    %834 = vmatpush.msra.mxu0 %v817
    %835 = vmatpush.msra.mxu0 %v816
    %836 = vmatpush.msra.mxu0 %v815
    %837 = vmatpush.msra.mxu0 %v814
    %838 = vmatpush.msra.mxu0 %v813
    %839 = vmatpush.msra.mxu0 %v812
    %840 = vmatpush.msra.mxu0 %v811
    %841 = vmatmul.f32.gmra.mxu0 %v820
    %v842 = vpop.f32.mrf.mxu0
    %v843 = vadd.f32 0.0, %v842
    %844 = vmatmul.f32.gmra.mxu0 %v823
    %v845 = vpop.f32.mrf.mxu0
    %v846 = vadd.f32 0.0, %v845
    %847 = vdwg.mxu0
    %v849 = vsel %vm775, %v791, 0
    %v852 = vsel %vm775, %v792, 0
    %854 = vmatpush.msra.mxu0 0.0
    %855 = vmatpush.msra.mxu0 0.0
    %856 = vmatpush.msra.mxu0 0.0
    %857 = vmatpush.msra.mxu0 0.0
    %858 = vmatpush.msra.mxu0 0.0
    %859 = vmatpush.msra.mxu0 0.0
    %860 = vmatpush.msra.mxu0 0.0
    %861 = vmatpush.msra.mxu0 0.0
    %862 = vmatpush.msra.mxu0 %v800
    %863 = vmatpush.msra.mxu0 %v799
    %864 = vmatpush.msra.mxu0 %v798
    %865 = vmatpush.msra.mxu0 %v797
    %866 = vmatpush.msra.mxu0 %v796
    %867 = vmatpush.msra.mxu0 %v795
    %868 = vmatpush.msra.mxu0 %v794
    %869 = vmatpush.msra.mxu0 %v793
    %870 = vmatmul.f32.gmra.mxu0 %v849
    %v871 = vpop.f32.mrf.mxu0
    %v872 = vadd.f32 %v843, %v871
    %873 = vmatmul.f32.gmra.mxu0 %v852
    %v874 = vpop.f32.mrf.mxu0
    %v875 = vadd.f32 %v846, %v874
    %876 = vdwg.mxu0
    %s877 = scalar_lea.vmem [#allocation3], 4
    %v878 = vld [vmem:[%s877] ss:$4 sm:$0xff]
    %s879 = scalar_lea.vmem [#allocation3], 36
    %v880 = vld [vmem:[%s879] ss:$4 sm:$0xff]
    %s881 = scalar_lea.vmem [#allocation3], 5
    %v882 = vld [vmem:[%s881] ss:$4 sm:$0xff]
    %s883 = scalar_lea.vmem [#allocation3], 37
    %v884 = vld [vmem:[%s883] ss:$4 sm:$0xff]
    %v885 = vmax.f32 %v878, %v882
    %v886 = vmax.f32 %v880, %v884
    %v887 = vld [vmem:[#allocation4 + $0x80] sm:$0xff]
    %v888 = vld [vmem:[#allocation4 + $0x88] sm:$0xff]
    %v889 = vld [vmem:[#allocation4 + $0x90] sm:$0xff]
    %v890 = vld [vmem:[#allocation4 + $0x98] sm:$0xff]
    %v891 = vld [vmem:[#allocation4 + $0xa0] sm:$0xff]
    %v892 = vld [vmem:[#allocation4 + $0xa8] sm:$0xff]
    %v893 = vld [vmem:[#allocation4 + $0xb0] sm:$0xff]
    %v894 = vld [vmem:[#allocation4 + $0xb8] sm:$0xff]
    %v896 = vsel %vm775, %v885, 0
    %v899 = vsel %vm775, %v886, 0
    %901 = vmatpush.msra.mxu0 0.0
    %902 = vmatpush.msra.mxu0 0.0
    %903 = vmatpush.msra.mxu0 0.0
    %904 = vmatpush.msra.mxu0 0.0
    %905 = vmatpush.msra.mxu0 0.0
    %906 = vmatpush.msra.mxu0 0.0
    %907 = vmatpush.msra.mxu0 0.0
    %908 = vmatpush.msra.mxu0 0.0
    %909 = vmatpush.msra.mxu0 %v894
    %910 = vmatpush.msra.mxu0 %v893
    %911 = vmatpush.msra.mxu0 %v892
    %912 = vmatpush.msra.mxu0 %v891
    %913 = vmatpush.msra.mxu0 %v890
    %914 = vmatpush.msra.mxu0 %v889
    %915 = vmatpush.msra.mxu0 %v888
    %916 = vmatpush.msra.mxu0 %v887
    %917 = vmatmul.f32.gmra.mxu0 %v896
    %v918 = vpop.f32.mrf.mxu0
    %v919 = vadd.f32 0.0, %v918
    %920 = vmatmul.f32.gmra.mxu0 %v899
    %v921 = vpop.f32.mrf.mxu0
    %v922 = vadd.f32 0.0, %v921
    %923 = vdwg.mxu0
    %v924 = vadd.f32 %v872, %v919
    %v925 = vadd.f32 %v875, %v922
    %v926 = vld [vmem:[%s6] sm:$0x1]
    %v928 = vperm.slane %v926, 0
    %v930 = vadd.f32 %v924, %v928
    %v931 = vadd.f32 %v925, %v928
    %v932 = vmax.f32 %v930, 0.0
    %v933 = vmax.f32 %v931, 0.0
    %934 = vmatpush.msra.mxu0 0.0
    %935 = vmatpush.msra.mxu0 0.0
    %936 = vmatpush.msra.mxu0 0.0
    %937 = vmatpush.msra.mxu0 0.0
    %938 = vmatpush.msra.mxu0 0.0
    %939 = vmatpush.msra.mxu0 0.0
    %940 = vmatpush.msra.mxu0 0.0
    %941 = vmatpush.msra.mxu0 0.0
    %942 = vmatpush.msra.mxu0 %v818
    %943 = vmatpush.msra.mxu0 %v817
    %944 = vmatpush.msra.mxu0 %v816
    %945 = vmatpush.msra.mxu0 %v815
    %946 = vmatpush.msra.mxu0 %v814
    %947 = vmatpush.msra.mxu0 %v813
    %948 = vmatpush.msra.mxu0 %v812
    %949 = vmatpush.msra.mxu0 %v811
    %950 = vmatmul.f32.gmra.mxu0 %v896
    %v951 = vpop.f32.mrf.mxu0
    %v952 = vadd.f32 0.0, %v951
    %953 = vmatmul.f32.gmra.mxu0 %v899
    %v954 = vpop.f32.mrf.mxu0
    %v955 = vadd.f32 0.0, %v954
    %956 = vdwg.mxu0
    %957 = vmatpush.msra.mxu0 0.0
    %958 = vmatpush.msra.mxu0 0.0
    %959 = vmatpush.msra.mxu0 0.0
    %960 = vmatpush.msra.mxu0 0.0
    %961 = vmatpush.msra.mxu0 0.0
    %962 = vmatpush.msra.mxu0 0.0
    %963 = vmatpush.msra.mxu0 0.0
    %964 = vmatpush.msra.mxu0 0.0
    %965 = vmatpush.msra.mxu0 %v800
    %966 = vmatpush.msra.mxu0 %v799
    %967 = vmatpush.msra.mxu0 %v798
    %968 = vmatpush.msra.mxu0 %v797
    %969 = vmatpush.msra.mxu0 %v796
    %970 = vmatpush.msra.mxu0 %v795
    %971 = vmatpush.msra.mxu0 %v794
    %972 = vmatpush.msra.mxu0 %v793
    %973 = vmatmul.f32.gmra.mxu0 %v820
    %v974 = vpop.f32.mrf.mxu0
    %v975 = vadd.f32 %v952, %v974
    %976 = vmatmul.f32.gmra.mxu0 %v823
    %v977 = vpop.f32.mrf.mxu0
    %v978 = vadd.f32 %v955, %v977
    %979 = vdwg.mxu0
    %s980 = scalar_lea.vmem [#allocation3], 6
    %v981 = vld [vmem:[%s980] ss:$4 sm:$0xff]
    %s982 = scalar_lea.vmem [#allocation3], 38
    %v983 = vld [vmem:[%s982] ss:$4 sm:$0xff]
    %s984 = scalar_lea.vmem [#allocation3], 7
    %v985 = vld [vmem:[%s984] ss:$4 sm:$0xff]
    %s986 = scalar_lea.vmem [#allocation3], 39
    %v987 = vld [vmem:[%s986] ss:$4 sm:$0xff]
    %v988 = vmax.f32 %v981, %v985
    %v989 = vmax.f32 %v983, %v987
    %v991 = vsel %vm775, %v988, 0
    %v994 = vsel %vm775, %v989, 0
    %996 = vmatpush.msra.mxu0 0.0
    %997 = vmatpush.msra.mxu0 0.0
    %998 = vmatpush.msra.mxu0 0.0
    %999 = vmatpush.msra.mxu0 0.0
    %1000 = vmatpush.msra.mxu0 0.0
    %1001 = vmatpush.msra.mxu0 0.0
    %1002 = vmatpush.msra.mxu0 0.0
    %1003 = vmatpush.msra.mxu0 0.0
    %1004 = vmatpush.msra.mxu0 %v894
    %1005 = vmatpush.msra.mxu0 %v893
    %1006 = vmatpush.msra.mxu0 %v892
    %1007 = vmatpush.msra.mxu0 %v891
    %1008 = vmatpush.msra.mxu0 %v890
    %1009 = vmatpush.msra.mxu0 %v889
    %1010 = vmatpush.msra.mxu0 %v888
    %1011 = vmatpush.msra.mxu0 %v887
    %1012 = vmatmul.f32.gmra.mxu0 %v991
    %v1013 = vpop.f32.mrf.mxu0
    %v1014 = vadd.f32 0.0, %v1013
    %1015 = vmatmul.f32.gmra.mxu0 %v994
    %v1016 = vpop.f32.mrf.mxu0
    %v1017 = vadd.f32 0.0, %v1016
    %1018 = vdwg.mxu0
    %v1019 = vadd.f32 %v975, %v1014
    %v1020 = vadd.f32 %v978, %v1017
    %v1021 = vadd.f32 %v1019, %v928
    %v1022 = vadd.f32 %v1020, %v928
    %v1023 = vmax.f32 %v1021, 0.0
    %v1024 = vmax.f32 %v1022, 0.0
    %v1025 = vmax.f32 %v932, %v1023
    %v1026 = vmax.f32 %v933, %v1024
    %1027 = vst [vmem:[#allocation7] sm:$0xff] %v1025
    %1028 = vst [vmem:[#allocation7 + $0x8] sm:$0xff] %v1026
    // Predicated region
    $region34: #{tpu_custom_call.1} parent=1 // pred_check
      _
    $region35: #{tpu_custom_call.1} parent=1 // pred_check_branch
      %1030 = sbr.rel (0) target = $region37
    $region36: #{tpu_custom_call.1} parent=1 // pred_region
      %1032 = vsyncadd [#allocation6], 0
      %s1033 = sshll.u32 [#allocation7], 4
      %s1034 = int_to_ptr.vmem [resolvable:$true] %s1033
      %s1035 = sshll.u32 %s7, 4
      %s1036 = int_to_ptr.hbm [resolvable:$true] %s1035
      %1041 = dma.vmem_to_hbm [thread:$0]  %s1034, 256, %s1036, [#allocation6], 128, 128, 8
    $region37: #{tpu_custom_call.1} parent=1 // pred_fallthru
      _
    // Predicated region
    $region38: #{tpu_custom_call.1} parent=1 // pred_check
      _
    $region39: #{tpu_custom_call.1} parent=1 // pred_check_branch
      %1043 = sbr.rel (0) target = $region41
    $region40: #{tpu_custom_call.1} parent=1 // pred_region
      %1045 = dma.done [#allocation6], 256
    $region41: #{tpu_custom_call.1} parent=1 // pred_fallthru
      _
    %1046 = vsyncpa [#allocation5], 1
    %1047 = vsyncpa [#allocation6], 1

</llo_original>
